<compile_context>
chip_gen: v5e
topology: v5e:2x2
jax: 0.10.0
libtpu: 0.0.40
codegen_flags: <defaults>
</compile_context>

<pallas_src>
import math

import jax
import jax.numpy as jnp
from jax.experimental import pallas as pl
from jax.experimental.pallas import tpu as pltpu

LAYER_NORM_EPS = 1e-12  # BERT default

# Abramowitz & Stegun 7.1.26 erf approximation (max abs error ~1.5e-7).
# exp + VPU ops only -> guaranteed Mosaic lowering; matches exact-erf GELU to ~1e-7.
_ERF_P = 0.3275911
_ERF_A1 = 0.254829592
_ERF_A2 = -0.284496736
_ERF_A3 = 1.421413741
_ERF_A4 = -1.453152027
_ERF_A5 = 1.061405429
_INV_SQRT2 = 1.0 / math.sqrt(2.0)


def _erf_f32(x):
    a = jnp.abs(x)
    t = 1.0 / (1.0 + _ERF_P * a)
    poly = t * (_ERF_A1 + t * (_ERF_A2 + t * (_ERF_A3 + t * (_ERF_A4 + t * _ERF_A5))))
    e = 1.0 - poly * jnp.exp(-a * a)
    return jnp.where(x >= 0.0, e, -e)


def _gelu_f32(x):
    # gelu(x) = x * 0.5 * (1 + erf(x / sqrt(2)))
    return x * 0.5 * (1.0 + _erf_f32(x * _INV_SQRT2))


def _lm_head_kernel(x_ref, wt_ref, bt_ref, g_ref, beta_ref, wd_ref, bd_ref,
                    o_ref, t_ref):
    # x_ref:   (tm, H)   sequence_output row tile
    # wt_ref:  (H, H)    transform dense weight, PyTorch (out, in) layout
    # bt_ref:  (1, H)    transform dense bias
    # g_ref:   (1, H)    LayerNorm gamma
    # beta_ref:(1, H)    LayerNorm beta
    # wd_ref:  (tv, H)   decoder weight tile, PyTorch (vocab, in) layout
    # bd_ref:  (1, tv)   decoder bias tile
    # o_ref:   (tm, tv)  logits tile
    # t_ref:   (tm, H)   VMEM scratch holding the transformed row tile
    j = pl.program_id(1)

    @pl.when(j == 0)
    def _():
        # Dense: x @ Wt^T  (contract shared H axis; no transposed copy in HBM).
        y = jax.lax.dot_general(
            x_ref[...], wt_ref[...],
            dimension_numbers=(((1,), (1,)), ((), ())),
            preferred_element_type=jnp.float32,
        )
        y = y + bt_ref[...].astype(jnp.float32)
        y = _gelu_f32(y)
        # Two-pass LayerNorm (subtract mean before variance) in f32.
        mean = jnp.mean(y, axis=-1, keepdims=True)
        yc = y - mean
        var = jnp.mean(yc * yc, axis=-1, keepdims=True)
        y = yc * jax.lax.rsqrt(var + LAYER_NORM_EPS)
        y = y * g_ref[...].astype(jnp.float32) + beta_ref[...].astype(jnp.float32)
        t_ref[...] = y.astype(t_ref.dtype)

    # Decoder: t @ Wd^T + bias for this vocab tile (native dtype into MXU,
    # f32 accumulation).
    logits = jax.lax.dot_general(
        t_ref[...], wd_ref[...],
        dimension_numbers=(((1,), (1,)), ((), ())),
        preferred_element_type=jnp.float32,
    )
    o_ref[...] = (logits + bd_ref[...].astype(jnp.float32)).astype(o_ref.dtype)


def _round_up(x, m):
    return (x + m - 1) // m * m


def _const_spec(block_shape, index_map):
    """Constant-index block: single-buffer it to reclaim VMEM (zero cost)."""
    try:
        return pl.BlockSpec(block_shape, index_map, pipeline_mode=pl.Buffered(1))
    except Exception:  # older jax without pipeline_mode: fall back to default
        return pl.BlockSpec(block_shape, index_map)


def _tile_vmem_bytes(tm, tv, H, act_bytes):
    """Conservative per-step VMEM footprint of the LM-head kernel."""
    return (2 * tm * H * act_bytes        # x tile (double-buffered, index changes with i)
            + 2 * tv * H * act_bytes      # decoder weight tile (hot stream, double-buffered)
            + 2 * tm * tv * act_bytes     # logits output tile (double-buffered)
            + tm * H * act_bytes          # transformed-row scratch
            + 3 * tm * H * 4              # f32 transform temporaries (dense/GELU/LN)
            + H * H * act_bytes           # transform weight (single-buffered constant)
            + 16 * H * 4                  # transform bias + LN gamma/beta
            + 2 * tv * act_bytes)         # decoder bias tile


def _select_tiles(M, V, H, act_bytes, budget):
    """Largest (tm, tv) that fits the VMEM budget; prefers big tm (cuts
    decoder-weight re-streaming) and a fully-resident row block when M fits."""
    m_ceil = _round_up(M, 8)
    v_ceil = _round_up(V, 128)

    tm_cands = []
    if m_ceil <= 2048:                       # resident rows: weight streamed once
        tm_cands.append(m_ceil)
    tm_cands += [t for t in (1024, 512, 256, 128, 64, 32, 16, 8) if t < m_ceil]

    for tm in tm_cands:
        for tv in (2048, 1536, 1024, 768, 512, 384, 256, 128):
            tv = min(tv, v_ceil)
            if _tile_vmem_bytes(tm, tv, H, act_bytes) <= budget:
                return tm, tv
    return 8, 128  # last-resort minimal tiles


def bert_pretraining_heads(
    sequence_output, pooled_output,
    transform_weight, transform_bias, ln_gamma, ln_beta,
    decoder_weight, decoder_bias,
    seq_rel_weight, seq_rel_bias,
    *, lm_matmul_dtype=None,
):
    """sequence_output: (B,S,H); pooled_output: (B,H); weights in PyTorch layout.

    lm_matmul_dtype: optionally (e.g. jnp.bfloat16 on v5e with f32 params) the
    dtype used for the LN-output scratch and decoder weight fed to the MXU
    (accumulation stays f32).
    """
    B, S, H = sequence_output.shape
    V = decoder_weight.shape[0]
    M = B * S
    dtype = sequence_output.dtype
    act_bytes = jnp.dtype(dtype).itemsize

    # ---- generation-aware VMEM budget ------------------------------------
    try:
        vmem_cap = int(pltpu.get_tpu_info().vmem_capacity_bytes)
    except Exception:
        vmem_cap = 64 << 20                      # conservative (v7x-sized) fallback
    vmem_limit = min(int(vmem_cap * 0.75), 96 << 20)   # ~48 MiB v7x, 96 MiB v5e/v6e
    tile_budget = int(vmem_limit * 0.85)

    tm, tv = _select_tiles(M, V, H, act_bytes, tile_budget)
    m_pad = _round_up(M, tm)
    v_pad = _round_up(V, tv)
    grid = (m_pad // tm, v_pad // tv)

    # ---- inputs (pad only when needed; in production pre-pad params once) --
    x2d = sequence_output.reshape(M, H)
    if m_pad != M:
        x2d = jnp.pad(x2d, ((0, m_pad - M), (0, 0)))

    wd = decoder_weight
    bd = decoder_bias
    if v_pad != V:
        # TODO(synk): hoist this pad to parameter setup (or pad vocab at the
        # model level) so the full decoder weight is not copied per call.
        wd = jnp.pad(wd, ((0, v_pad - V), (0, 0)))
        bd = jnp.pad(bd, (0, v_pad - V))

    if lm_matmul_dtype is not None and jnp.dtype(lm_matmul_dtype) != jnp.dtype(dtype):
        # TODO(synk): in production cast the decoder weight once at param setup.
        wd = wd.astype(lm_matmul_dtype)
        scratch_dtype = jnp.dtype(lm_matmul_dtype)
    else:
        scratch_dtype = dtype

    bt2d = transform_bias.reshape(1, H)
    g2d = ln_gamma.reshape(1, H)
    beta2d = ln_beta.reshape(1, H)
    bd2d = bd.reshape(1, v_pad)

    cost = pl.CostEstimate(
        flops=int(2 * m_pad * H * H + 2 * m_pad * H * v_pad),
        transcendentals=int(m_pad * H),  # exp inside the erf-GELU
        bytes_accessed=int(act_bytes * (
            m_pad * H                       # activations in
            + grid[0] * v_pad * H           # decoder weight, streamed once per row tile
            + H * H + 4 * H + v_pad         # transform params + biases
            + m_pad * v_pad                 # logits out
        )),
    )

    scores2d = pl.pallas_call(
        _lm_head_kernel,
        out_shape=jax.ShapeDtypeStruct((m_pad, v_pad), dtype),
        grid_spec=pltpu.PrefetchScalarGridSpec(
            num_scalar_prefetch=0,
            grid=grid,
            in_specs=[
                pl.BlockSpec((tm, H), lambda i, j: (i, 0)),        # sequence rows
                _const_spec((H, H), lambda i, j: (0, 0)),          # transform weight
                _const_spec((1, H), lambda i, j: (0, 0)),          # transform bias
                _const_spec((1, H), lambda i, j: (0, 0)),          # LN gamma
                _const_spec((1, H), lambda i, j: (0, 0)),          # LN beta
                pl.BlockSpec((tv, H), lambda i, j: (j, 0)),        # decoder weight tile
                pl.BlockSpec((1, tv), lambda i, j: (0, j)),        # decoder bias tile
            ],
            out_specs=pl.BlockSpec((tm, tv), lambda i, j: (i, j)),
            scratch_shapes=[pltpu.VMEM((tm, H), scratch_dtype)],
        ),
        compiler_params=pltpu.CompilerParams(
            dimension_semantics=("parallel", "arbitrary"),
            vmem_limit_bytes=vmem_limit,
        ),
        cost_estimate=cost,
    )(x2d, transform_weight, bt2d, g2d, beta2d, wd, bd2d)

    if m_pad != M or v_pad != V:
        scores2d = scores2d[:M, :V]
    prediction_scores = scores2d.reshape(B, S, V)

    # seq_relationship head: a (B, 2) x (H) dense op — per perf review a
    # dedicated pallas_call (launch + (8,128) pad/slice) would cost more than
    # the op itself, so compute it with plain XLA.
    seq_relationship_score = (
        jnp.dot(pooled_output, seq_rel_weight.T,
                preferred_element_type=jnp.float32)
        + seq_rel_bias.astype(jnp.float32)
    ).astype(pooled_output.dtype)

    return prediction_scores, seq_relationship_score


def _reference(seq_out, pooled, t_w, t_b, g, be, d_w, d_b, s_w, s_b):
    y = jnp.einsum("bsh,oh->bso", seq_out, t_w) + t_b
    y = y * 0.5 * (1.0 + jax.lax.erf(y * (1.0 / math.sqrt(2.0))))
    mean = jnp.mean(y, axis=-1, keepdims=True)
    var = jnp.mean((y - mean) ** 2, axis=-1, keepdims=True)
    y = (y - mean) / jnp.sqrt(var + LAYER_NORM_EPS) * g + be
    scores = jnp.einsum("bsh,vh->bsv", y, d_w) + d_b
    rel = pooled @ s_w.T + s_b
    return scores, rel


if __name__ == "__main__":
    # Small shapes consistent with the module; V=100 exercises the vocab-pad path.
    B, S, H, V = 2, 8, 32, 100

    key = jax.random.PRNGKey(0)
    keys = jax.random.split(key, 10)

    sequence_output = jax.random.normal(keys[0], (B, S, H), dtype=jnp.float32)
    pooled_output = jax.random.normal(keys[1], (B, H), dtype=jnp.float32)

    # PyTorch nn.Linear layout: weight (out_features, in_features).
    t_w = 0.02 * jax.random.normal(keys[2], (H, H), dtype=jnp.float32)
    t_b = 0.02 * jax.random.normal(keys[3], (H,), dtype=jnp.float32)
    g = 1.0 + 0.01 * jax.random.normal(keys[4], (H,), dtype=jnp.float32)
    be = 0.01 * jax.random.normal(keys[5], (H,), dtype=jnp.float32)
    d_w = 0.02 * jax.random.normal(keys[6], (V, H), dtype=jnp.float32)
    d_b = 0.01 * jax.random.normal(keys[7], (V,), dtype=jnp.float32)
    s_w = 0.02 * jax.random.normal(keys[8], (2, H), dtype=jnp.float32)
    s_b = 0.01 * jax.random.normal(keys[9], (2,), dtype=jnp.float32)

    scores, rel = bert_pretraining_heads(
        sequence_output, pooled_output,
        t_w, t_b, g, be, d_w, d_b, s_w, s_b)
    scores = jax.block_until_ready(scores)
    rel = jax.block_until_ready(rel)

    ref_scores, ref_rel = _reference(
        sequence_output, pooled_output, t_w, t_b, g, be, d_w, d_b, s_w, s_b)

    assert scores.shape == (B, S, V)
    assert rel.shape == (B, 2)
    assert jnp.allclose(scores, ref_scores, atol=2e-3, rtol=2e-3), "prediction_scores mismatch"
    assert jnp.allclose(rel, ref_rel, atol=2e-3, rtol=2e-3), "seq_relationship mismatch"

    print("KERNEL_OK")
</pallas_src>

<mosaic_0001>
module attributes {stable_mosaic.version = 11 : i64} {
  func.func @_lm_head_kernel(%arg0: i32, %arg1: i32, %arg2: memref<16x32xf32, #tpu.memory_space<vmem>>, %arg3: memref<32x32xf32, #tpu.memory_space<vmem>>, %arg4: memref<1x32xf32, #tpu.memory_space<vmem>>, %arg5: memref<1x32xf32, #tpu.memory_space<vmem>>, %arg6: memref<1x32xf32, #tpu.memory_space<vmem>>, %arg7: memref<128x32xf32, #tpu.memory_space<vmem>>, %arg8: memref<1x128xf32, #tpu.memory_space<vmem>>, %arg9: memref<16x128xf32, #tpu.memory_space<vmem>>, %arg10: memref<16x32xf32, #tpu.memory_space<vmem>>) attributes {dimension_semantics = [#tpu.dimension_semantics<parallel>, #tpu.dimension_semantics<arbitrary>], iteration_bounds = array<i64: 1, 1>, scalar_prefetch = 0 : i64, scratch_operands = 1 : i64, tpu.core_type = #tpu.core_type<tc>, window_params = [{transform_indices = @transform_0, window_bounds = array<i64: 16, 32>}, {pipeline_mode = #tpu.pipeline_mode<synchronous>, transform_indices = @transform_1, window_bounds = array<i64: 32, 32>}, {pipeline_mode = #tpu.pipeline_mode<synchronous>, transform_indices = @transform_2, window_bounds = array<i64: 1, 32>}, {pipeline_mode = #tpu.pipeline_mode<synchronous>, transform_indices = @transform_3, window_bounds = array<i64: 1, 32>}, {pipeline_mode = #tpu.pipeline_mode<synchronous>, transform_indices = @transform_4, window_bounds = array<i64: 1, 32>}, {transform_indices = @transform_5, window_bounds = array<i64: 128, 32>}, {transform_indices = @transform_6, window_bounds = array<i64: 1, 128>}, {transform_indices = @transform_7, window_bounds = array<i64: 16, 128>}]} {
    %c0_i32 = arith.constant 0 : i32
    %0 = arith.cmpi eq, %arg1, %c0_i32 : i32
    %1 = arith.extui %0 : i1 to i32
    %c0_i32_0 = arith.constant 0 : i32
    %2 = arith.cmpi ne, %1, %c0_i32_0 : i32
    scf.if %2 {
      %c0_8 = arith.constant 0 : index
      %c0_9 = arith.constant 0 : index
      %10 = vector.load %arg2[%c0_8, %c0_9] : memref<16x32xf32, #tpu.memory_space<vmem>>, vector<16x32xf32>
      %c0_10 = arith.constant 0 : index
      %c0_11 = arith.constant 0 : index
      %11 = vector.load %arg3[%c0_10, %c0_11] : memref<32x32xf32, #tpu.memory_space<vmem>>, vector<32x32xf32>
      %cst_12 = arith.constant dense<0.000000e+00> : vector<16x32xf32>
      %12 = tpu.matmul %10, %11, %cst_12 {dimension_numbers = #tpu.dot_dimension_numbers<[1], [1], [0], [0], [0, 0, 1, 0], [], []>} : vector<16x32xf32>, vector<32x32xf32>, vector<16x32xf32> -> vector<16x32xf32>
      %c0_13 = arith.constant 0 : index
      %c0_14 = arith.constant 0 : index
      %13 = vector.load %arg4[%c0_13, %c0_14] : memref<1x32xf32, #tpu.memory_space<vmem>>, vector<1x32xf32>
      %14 = vector.broadcast %13 : vector<1x32xf32> to vector<16x32xf32>
      %15 = arith.addf %12, %14 : vector<16x32xf32>
      %cst_15 = arith.constant 5.000000e-01 : f32
      %16 = vector.broadcast %cst_15 : f32 to vector<16x32xf32>
      %17 = arith.mulf %15, %16 : vector<16x32xf32>
      %cst_16 = arith.constant 0.707106769 : f32
      %18 = vector.broadcast %cst_16 : f32 to vector<16x32xf32>
      %19 = arith.mulf %15, %18 : vector<16x32xf32>
      %20 = math.absf %19 : vector<16x32xf32>
      %cst_17 = arith.constant 0.327591091 : f32
      %21 = vector.broadcast %cst_17 : f32 to vector<16x32xf32>
      %22 = arith.mulf %21, %20 : vector<16x32xf32>
      %cst_18 = arith.constant 1.000000e+00 : f32
      %23 = vector.broadcast %cst_18 : f32 to vector<16x32xf32>
      %24 = arith.addf %23, %22 : vector<16x32xf32>
      %cst_19 = arith.constant 1.000000e+00 : f32
      %25 = vector.broadcast %cst_19 : f32 to vector<16x32xf32>
      %26 = arith.divf %25, %24 : vector<16x32xf32>
      %cst_20 = arith.constant 1.06140542 : f32
      %27 = vector.broadcast %cst_20 : f32 to vector<16x32xf32>
      %28 = arith.mulf %26, %27 : vector<16x32xf32>
      %cst_21 = arith.constant -1.45315206 : f32
      %29 = vector.broadcast %cst_21 : f32 to vector<16x32xf32>
      %30 = arith.addf %29, %28 : vector<16x32xf32>
      %31 = arith.mulf %26, %30 : vector<16x32xf32>
      %cst_22 = arith.constant 1.42141378 : f32
      %32 = vector.broadcast %cst_22 : f32 to vector<16x32xf32>
      %33 = arith.addf %32, %31 : vector<16x32xf32>
      %34 = arith.mulf %26, %33 : vector<16x32xf32>
      %cst_23 = arith.constant -0.284496725 : f32
      %35 = vector.broadcast %cst_23 : f32 to vector<16x32xf32>
      %36 = arith.addf %35, %34 : vector<16x32xf32>
      %37 = arith.mulf %26, %36 : vector<16x32xf32>
      %cst_24 = arith.constant 0.254829586 : f32
      %38 = vector.broadcast %cst_24 : f32 to vector<16x32xf32>
      %39 = arith.addf %38, %37 : vector<16x32xf32>
      %40 = arith.mulf %26, %39 : vector<16x32xf32>
      %cst_25 = arith.constant 0.000000e+00 : f32
      %41 = vector.broadcast %cst_25 : f32 to vector<16x32xf32>
      %42 = arith.subf %41, %20 : vector<16x32xf32>
      %43 = arith.mulf %42, %20 : vector<16x32xf32>
      %44 = math.exp %43 : vector<16x32xf32>
      %45 = arith.mulf %40, %44 : vector<16x32xf32>
      %cst_26 = arith.constant 1.000000e+00 : f32
      %46 = vector.broadcast %cst_26 : f32 to vector<16x32xf32>
      %47 = arith.subf %46, %45 : vector<16x32xf32>
      %cst_27 = arith.constant 0.000000e+00 : f32
      %48 = vector.broadcast %cst_27 : f32 to vector<16x32xf32>
      %49 = arith.cmpf oge, %19, %48 : vector<16x32xf32>
      %cst_28 = arith.constant 0.000000e+00 : f32
      %50 = vector.broadcast %cst_28 : f32 to vector<16x32xf32>
      %51 = arith.subf %50, %47 : vector<16x32xf32>
      %52 = arith.select %49, %47, %51 : vector<16x32xi1>, vector<16x32xf32>
      %cst_29 = arith.constant 1.000000e+00 : f32
      %53 = vector.broadcast %cst_29 : f32 to vector<16x32xf32>
      %54 = arith.addf %53, %52 : vector<16x32xf32>
      %55 = arith.mulf %17, %54 : vector<16x32xf32>
      %cst_30 = arith.constant dense<0.000000e+00> : vector<16xf32>
      %56 = vector.multi_reduction <add>, %55, %cst_30 [1] : vector<16x32xf32> to vector<16xf32>
      %57 = vector.shape_cast %56 : vector<16xf32> to vector<16x1xf32>
      %cst_31 = arith.constant 3.200000e+01 : f32
      %58 = vector.broadcast %cst_31 : f32 to vector<16x1xf32>
      %59 = arith.divf %57, %58 : vector<16x1xf32>
      %60 = vector.broadcast %59 : vector<16x1xf32> to vector<16x32xf32>
      %61 = arith.subf %55, %60 : vector<16x32xf32>
      %62 = arith.mulf %61, %61 : vector<16x32xf32>
      %cst_32 = arith.constant dense<0.000000e+00> : vector<16xf32>
      %63 = vector.multi_reduction <add>, %62, %cst_32 [1] : vector<16x32xf32> to vector<16xf32>
      %64 = vector.shape_cast %63 : vector<16xf32> to vector<16x1xf32>
      %cst_33 = arith.constant 3.200000e+01 : f32
      %65 = vector.broadcast %cst_33 : f32 to vector<16x1xf32>
      %66 = arith.divf %64, %65 : vector<16x1xf32>
      %cst_34 = arith.constant 9.99999996E-13 : f32
      %67 = vector.broadcast %cst_34 : f32 to vector<16x1xf32>
      %68 = arith.addf %66, %67 : vector<16x1xf32>
      %69 = math.rsqrt %68 : vector<16x1xf32>
      %70 = vector.broadcast %69 : vector<16x1xf32> to vector<16x32xf32>
      %71 = arith.mulf %61, %70 : vector<16x32xf32>
      %c0_35 = arith.constant 0 : index
      %c0_36 = arith.constant 0 : index
      %72 = vector.load %arg5[%c0_35, %c0_36] : memref<1x32xf32, #tpu.memory_space<vmem>>, vector<1x32xf32>
      %73 = vector.broadcast %72 : vector<1x32xf32> to vector<16x32xf32>
      %74 = arith.mulf %71, %73 : vector<16x32xf32>
      %c0_37 = arith.constant 0 : index
      %c0_38 = arith.constant 0 : index
      %75 = vector.load %arg6[%c0_37, %c0_38] : memref<1x32xf32, #tpu.memory_space<vmem>>, vector<1x32xf32>
      %76 = vector.broadcast %75 : vector<1x32xf32> to vector<16x32xf32>
      %77 = arith.addf %74, %76 : vector<16x32xf32>
      %c0_39 = arith.constant 0 : index
      %c0_40 = arith.constant 0 : index
      %78 = vector.load %arg10[%c0_39, %c0_40] : memref<16x32xf32, #tpu.memory_space<vmem>>, vector<16x32xf32>
      tpu.vector_store %arg10[%c0_39, %c0_40], %77 {strides = array<i32>} : memref<16x32xf32, #tpu.memory_space<vmem>>, vector<16x32xf32>,
    } else {
    }
    %c0 = arith.constant 0 : index
    %c0_1 = arith.constant 0 : index
    %3 = vector.load %arg10[%c0, %c0_1] : memref<16x32xf32, #tpu.memory_space<vmem>>, vector<16x32xf32>
    %c0_2 = arith.constant 0 : index
    %c0_3 = arith.constant 0 : index
    %4 = vector.load %arg7[%c0_2, %c0_3] : memref<128x32xf32, #tpu.memory_space<vmem>>, vector<128x32xf32>
    %cst = arith.constant dense<0.000000e+00> : vector<16x128xf32>
    %5 = tpu.matmul %3, %4, %cst {dimension_numbers = #tpu.dot_dimension_numbers<[1], [1], [0], [0], [0, 0, 1, 0], [], []>} : vector<16x32xf32>, vector<128x32xf32>, vector<16x128xf32> -> vector<16x128xf32>
    %c0_4 = arith.constant 0 : index
    %c0_5 = arith.constant 0 : index
    %6 = vector.load %arg8[%c0_4, %c0_5] : memref<1x128xf32, #tpu.memory_space<vmem>>, vector<1x128xf32>
    %7 = vector.broadcast %6 : vector<1x128xf32> to vector<16x128xf32>
    %8 = arith.addf %5, %7 : vector<16x128xf32>
    %c0_6 = arith.constant 0 : index
    %c0_7 = arith.constant 0 : index
    %9 = vector.load %arg9[%c0_6, %c0_7] : memref<16x128xf32, #tpu.memory_space<vmem>>, vector<16x128xf32>
    tpu.vector_store %arg9[%c0_6, %c0_7], %8 {strides = array<i32>} : memref<16x128xf32, #tpu.memory_space<vmem>>, vector<16x128xf32>,
    return
  }
  func.func @transform_0(%arg0: i32, %arg1: i32) -> (i32, i32) {
    %c0_i32 = arith.constant 0 : i32
    %c0_i32_0 = arith.constant 0 : i32
    return %arg0, %c0_i32 : i32, i32
  }
  func.func @transform_1(%arg0: i32, %arg1: i32) -> (i32, i32) {
    %c0_i32 = arith.constant 0 : i32
    %c0_i32_0 = arith.constant 0 : i32
    %c0_i32_1 = arith.constant 0 : i32
    return %c0_i32, %c0_i32_0 : i32, i32
  }
  func.func @transform_2(%arg0: i32, %arg1: i32) -> (i32, i32) {
    %c0_i32 = arith.constant 0 : i32
    %c0_i32_0 = arith.constant 0 : i32
    %c0_i32_1 = arith.constant 0 : i32
    return %c0_i32, %c0_i32_0 : i32, i32
  }
  func.func @transform_3(%arg0: i32, %arg1: i32) -> (i32, i32) {
    %c0_i32 = arith.constant 0 : i32
    %c0_i32_0 = arith.constant 0 : i32
    %c0_i32_1 = arith.constant 0 : i32
    return %c0_i32, %c0_i32_0 : i32, i32
  }
  func.func @transform_4(%arg0: i32, %arg1: i32) -> (i32, i32) {
    %c0_i32 = arith.constant 0 : i32
    %c0_i32_0 = arith.constant 0 : i32
    %c0_i32_1 = arith.constant 0 : i32
    return %c0_i32, %c0_i32_0 : i32, i32
  }
  func.func @transform_5(%arg0: i32, %arg1: i32) -> (i32, i32) {
    %c0_i32 = arith.constant 0 : i32
    %c0_i32_0 = arith.constant 0 : i32
    return %arg1, %c0_i32 : i32, i32
  }
  func.func @transform_6(%arg0: i32, %arg1: i32) -> (i32, i32) {
    %c0_i32 = arith.constant 0 : i32
    %c0_i32_0 = arith.constant 0 : i32
    return %c0_i32, %arg1 : i32, i32
  }
  func.func @transform_7(%arg0: i32, %arg1: i32) -> (i32, i32) {
    %c0_i32 = arith.constant 0 : i32
    return %arg0, %arg1 : i32, i32
  }
}

</mosaic_0001>

<llo_original>
// kernel: tpu_custom_call.1
$region0: #{tpu_custom_call.1}
  #allocation0 [shape = 'u32[]', space=smem, size = 0x4, offset = 0x4, fixed_abs, tag = 'smem constant byte address 0x4 - core index']
  #allocation1 [shape = 'u32[72,128]{1,0:T(1,128)}', space=vmem, size = 0x9000, scoped, tag = 'internal scratch']
  #allocation2 [shape = 'f32[16,32]{1,0:T(8,128)}', space=vmem, size = 0x2000, scoped, tag = 'scratch operand']
  %s0 = inlined_call_operand.vmem [shape: f32[16,32], index: 0, kind: input, shape index: {}]
  %s1 = inlined_call_operand.vmem [shape: f32[32,32], index: 1, kind: input, shape index: {}]
  %s2 = inlined_call_operand.vmem [shape: f32[1,32], index: 2, kind: input, shape index: {}]
  %s3 = inlined_call_operand.vmem [shape: f32[1,32], index: 3, kind: input, shape index: {}]
  %s4 = inlined_call_operand.vmem [shape: f32[1,32], index: 4, kind: input, shape index: {}]
  %s5 = inlined_call_operand.vmem [shape: f32[128,32], index: 5, kind: input, shape index: {}]
  %s6 = inlined_call_operand.vmem [shape: f32[1,128], index: 6, kind: input, shape index: {}]
  %s7 = inlined_call_operand.hbm [shape: f32[16,128], index: 7, kind: output, shape index: {}]
  %s8 = sld [smem:[#allocation0]]
  $region42: #{tpu_custom_call.1} parent=0
    _
  %s10 = ssub.s32 1, %s8
  %s11 = scalar_select 0, %s10, %s8
  $region1: #{tpu_custom_call.1} parent=0
    #allocation3 [shape = 'u8[8192]{0}', space=vmem, size = 0x2000, scoped, tag = 'output window, operand 0, single buffered']
    #allocation4 [shape = 's32[1]{0}', space=sflag, size = 0x4, scoped, tag = 'scoped memory for tpu_custom_call.1']
    %12 = vsyncpa [#allocation4], 0
    // Predicated region
    $region2: #{tpu_custom_call.1} parent=1 // pred_check
      _
    $region3: #{tpu_custom_call.1} parent=1 // pred_check_branch
      %14 = sbr.rel (0) target = $region5
    $region4: #{tpu_custom_call.1} parent=1 // pred_region
      _
    $region5: #{tpu_custom_call.1} parent=1 // pred_fallthru
      _
    // Predicated region
    $region6: #{tpu_custom_call.1} parent=1 // pred_check
      _
    $region7: #{tpu_custom_call.1} parent=1 // pred_check_branch
      %16 = sbr.rel (0) target = $region9
    $region8: #{tpu_custom_call.1} parent=1 // pred_region
      _
    $region9: #{tpu_custom_call.1} parent=1 // pred_fallthru
      _
    // Predicated region
    $region10: #{tpu_custom_call.1} parent=1 // pred_check
      _
    $region11: #{tpu_custom_call.1} parent=1 // pred_check_branch
      %18 = sbr.rel (0) target = $region13
    $region12: #{tpu_custom_call.1} parent=1 // pred_region
      _
    $region13: #{tpu_custom_call.1} parent=1 // pred_fallthru
      _
    // Predicated region
    $region14: #{tpu_custom_call.1} parent=1 // pred_check
      _
    $region15: #{tpu_custom_call.1} parent=1 // pred_check_branch
      %20 = sbr.rel (0) target = $region17
    $region16: #{tpu_custom_call.1} parent=1 // pred_region
      _
    $region17: #{tpu_custom_call.1} parent=1 // pred_fallthru
      _
    // Predicated region
    $region18: #{tpu_custom_call.1} parent=1 // pred_check
      _
    $region19: #{tpu_custom_call.1} parent=1 // pred_check_branch
      %22 = sbr.rel (0) target = $region21
    $region20: #{tpu_custom_call.1} parent=1 // pred_region
      _
    $region21: #{tpu_custom_call.1} parent=1 // pred_fallthru
      _
    // Predicated region
    $region22: #{tpu_custom_call.1} parent=1 // pred_check
      _
    $region23: #{tpu_custom_call.1} parent=1 // pred_check_branch
      %24 = sbr.rel (0) target = $region25
    $region24: #{tpu_custom_call.1} parent=1 // pred_region
      _
    $region25: #{tpu_custom_call.1} parent=1 // pred_fallthru
      _
    // Predicated region
    $region26: #{tpu_custom_call.1} parent=1 // pred_check
      _
    $region27: #{tpu_custom_call.1} parent=1 // pred_check_branch
      %26 = sbr.rel (0) target = $region29
    $region28: #{tpu_custom_call.1} parent=1 // pred_region
      _
    $region29: #{tpu_custom_call.1} parent=1 // pred_fallthru
      _
    %p27 = scmp.eq.s32.totalorder 0, 0
    // Predicated region
    $region30: #{tpu_custom_call.1} parent=1 // pred_check
      %p28 = pneg %p27
    $region31: #{tpu_custom_call.1} parent=1 // pred_check_branch
      %30 = sbr.rel (%p28) target = $region33
    $region32: #{tpu_custom_call.1} parent=1 // pred_region
      %v31 = vld [vmem:[%s0] sm:$0xff]
      %v32 = vld [vmem:[%s0 + $0x8] sm:$0xff]
      %v33 = vld [vmem:[%s1] sm:$0xff]
      %v34 = vld [vmem:[%s1 + $0x8] sm:$0xff]
      %v35 = vld [vmem:[%s1 + $0x10] sm:$0xff]
      %v36 = vld [vmem:[%s1 + $0x18] sm:$0xff]
      %v37 = vld [vmem:[%s2] sm:$0x1]
      %v39 = vperm.slane %v37, 0
      %vm41 = vcmask 261120
      %v43 = vsel %vm41, %v31, 0
      %v46 = vsel %vm41, %v32, 0
      %v49 = vsel %vm41, %v33, 0
      %v52 = vsel %vm41, %v34, 0
      %v55 = vsel %vm41, %v35, 0
      %v58 = vsel %vm41, %v36, 0
      %60 = vmatpush.xpose.msra.mxu0 0.0
      %61 = vmatpush.xpose.msra.mxu0 0.0
      %62 = vmatpush.xpose.msra.mxu0 0.0
      %63 = vmatpush.xpose.msra.mxu0 0.0
      %64 = vmatpush.xpose.msra.mxu0 0.0
      %65 = vmatpush.xpose.msra.mxu0 0.0
      %66 = vmatpush.xpose.msra.mxu0 0.0
      %67 = vmatpush.xpose.msra.mxu0 0.0
      %68 = vmatpush.xpose.msra.mxu0 0.0
      %69 = vmatpush.xpose.msra.mxu0 0.0
      %70 = vmatpush.xpose.msra.mxu0 0.0
      %71 = vmatpush.xpose.msra.mxu0 0.0
      %72 = vmatpush.xpose.msra.mxu0 %v58
      %73 = vmatpush.xpose.msra.mxu0 %v55
      %74 = vmatpush.xpose.msra.mxu0 %v52
      %75 = vmatpush.xpose.msra.mxu0 %v49
      %76 = vmatmul.f32.gmra.mxu0 %v43
      %v77 = vpop.f32.mrf.mxu0
      %v78 = vadd.f32 %v39, %v77
      %79 = vmatmul.f32.gmra.mxu0 %v46
      %v80 = vpop.f32.mrf.mxu0
      %v81 = vadd.f32 %v39, %v80
      %82 = vdwg.mxu0
      %v83 = vmul.f32 %v78, 0.5
      %v84 = vmul.f32 %v81, 0.5
      %v85 = vmul.f32 %v78, 0.70710677
      %v86 = vmul.f32 %v81, 0.70710677
      %v87 = vand.u32 2147483647, %v85
      %v88 = vand.u32 2147483647, %v86
      %v89 = vmul.f32 %v87, 0.3275911
      %v90 = vmul.f32 %v88, 0.3275911
      %v91 = vadd.f32 %v89, 1.0
      %v92 = vadd.f32 %v90, 1.0
      %v93 = vrcp.pop %v91
      %v94 = vmul.f32 %v91, %v93
      %v95 = vsub.f32 1.0, %v94
      %v96 = vmul.f32 %v93, %v95
      %v97 = vadd.f32 %v93, %v96
      %vm98 = vweird.f32 %v91
      %vm99 = vweird.f32 %v93
      %vm100 = vmor %vm98, %vm99
      %v101 = vsel %vm100, %v93, %v97
      %v102 = vand.u32 2147483647, %v91
      %vm103 = vcmp.eq.f32.partialorder %v102, 8.507059e+37
      %v104 = vand.u32 %v91, 2147483648
      %v105 = vor.u32 1.1754944e-38, %v104
      %v106 = vsel %vm103, %v105, %v101
      %v107 = vmul.f32 1.0, %v106
      %v108 = vrcp.pop %v92
      %v109 = vmul.f32 %v92, %v108
      %v110 = vsub.f32 1.0, %v109
      %v111 = vmul.f32 %v108, %v110
      %v112 = vadd.f32 %v108, %v111
      %vm113 = vweird.f32 %v92
      %vm114 = vweird.f32 %v108
      %vm115 = vmor %vm113, %vm114
      %v116 = vsel %vm115, %v108, %v112
      %v117 = vand.u32 2147483647, %v92
      %vm118 = vcmp.eq.f32.partialorder %v117, 8.507059e+37
      %v119 = vand.u32 %v92, 2147483648
      %v120 = vor.u32 1.1754944e-38, %v119
      %v121 = vsel %vm118, %v120, %v116
      %v122 = vmul.f32 1.0, %v121
      %v123 = vmul.f32 %v107, 1.0614054
      %v124 = vmul.f32 %v122, 1.0614054
      %v125 = vadd.f32 %v123, -1.4531521
      %v126 = vadd.f32 %v124, -1.4531521
      %v127 = vmul.f32 %v107, %v125
      %v128 = vmul.f32 %v122, %v126
      %v129 = vadd.f32 %v127, 1.4214138
      %v130 = vadd.f32 %v128, 1.4214138
      %v131 = vmul.f32 %v107, %v129
      %v132 = vmul.f32 %v122, %v130
      %v133 = vadd.f32 %v131, -0.28449672
      %v134 = vadd.f32 %v132, -0.28449672
      %v135 = vmul.f32 %v107, %v133
      %v136 = vmul.f32 %v122, %v134
      %v137 = vadd.f32 %v135, 0.2548296
      %v138 = vadd.f32 %v136, 0.2548296
      %v139 = vmul.f32 %v107, %v137
      %v140 = vmul.f32 %v122, %v138
      %v141 = vsub.f32 0.0, %v87
      %v142 = vsub.f32 0.0, %v88
      %v143 = vmul.f32 %v141, %v87
      %v144 = vmul.f32 %v142, %v88
      %v145 = vmul.f32 %v143, 1.442695
      %v146 = vpow.pop %v145
      %v147 = vmul.f32 %v144, 1.442695
      %v148 = vpow.pop %v147
      %v149 = vmul.f32 %v139, %v146
      %v150 = vmul.f32 %v140, %v148
      %v151 = vsub.f32 1.0, %v149
      %v152 = vsub.f32 1.0, %v150
      %vm153 = vcmp.ge.f32.partialorder %v85, 0.0
      %vm154 = vcmp.ge.f32.partialorder %v86, 0.0
      %v155 = vsub.f32 0.0, %v151
      %v156 = vsub.f32 0.0, %v152
      %v157 = vsel %vm153, %v151, %v155
      %v158 = vsel %vm154, %v152, %v156
      %v159 = vadd.f32 %v157, 1.0
      %v160 = vadd.f32 %v158, 1.0
      %v161 = vmul.f32 %v83, %v159
      %v162 = vmul.f32 %v84, %v160
      %v163 = vsel %vm41, %v161, 0.0
      %164 = vadd.xlane.f32.xlu0 %v163
      %v165 = vpop.xlane.xlu0 %164
      %v166 = vsel %vm41, %v162, 0.0
      %167 = vadd.xlane.f32.xlu0 %v166
      %v168 = vpop.xlane.xlu0 %167
      %v169 = vrcp.pop 32.0
      %v170 = vmul.f32 32.0, %v169
      %v171 = vsub.f32 1.0, %v170
      %v172 = vmul.f32 %v169, %v171
      %v173 = vadd.f32 %v169, %v172
      %vm174 = vweird.f32 %v169
      %v175 = vsel %vm174, %v169, %v173
      %v176 = vmul.f32 %v165, %v175
      %v177 = vmul.f32 %v168, %v175
      %v178 = vsub.f32 %v161, %v176
      %v179 = vsub.f32 %v162, %v177
      %v180 = vmul.f32 %v178, %v178
      %v181 = vmul.f32 %v179, %v179
      %v182 = vsel %vm41, %v180, 0.0
      %183 = vadd.xlane.f32.xlu0 %v182
      %v184 = vpop.xlane.xlu0 %183
      %v185 = vsel %vm41, %v181, 0.0
      %186 = vadd.xlane.f32.xlu0 %v185
      %v187 = vpop.xlane.xlu0 %186
      %v188 = vmul.f32 %v184, %v175
      %v189 = vmul.f32 %v187, %v175
      %v190 = vadd.f32 %v188, 1e-12
      %v191 = vadd.f32 %v189, 1e-12
      %v192 = vrsqrt.pop %v190
      %v193 = vmul.f32 %v192, %v190
      %v194 = vmul.f32 %v193, %v192
      %v195 = vmul.f32 0.5, %v194
      %v196 = vsub.f32 1.5, %v195
      %v197 = vmul.f32 %v192, %v196
      %vm198 = vweird.f32 %v190
      %vm199 = vweird.f32 %v192
      %vm200 = vmor %vm198, %vm199
      %v201 = vsel %vm200, %v192, %v197
      %v202 = vrsqrt.pop %v191
      %v203 = vmul.f32 %v202, %v191
      %v204 = vmul.f32 %v203, %v202
      %v205 = vmul.f32 0.5, %v204
      %v206 = vsub.f32 1.5, %v205
      %v207 = vmul.f32 %v202, %v206
      %vm208 = vweird.f32 %v191
      %vm209 = vweird.f32 %v202
      %vm210 = vmor %vm208, %vm209
      %v211 = vsel %vm210, %v202, %v207
      %v212 = vmul.f32 %v178, %v201
      %v213 = vmul.f32 %v179, %v211
      %v214 = vld [vmem:[%s3] sm:$0x1]
      %v216 = vperm.slane %v214, 0
      %v218 = vmul.f32 %v212, %v216
      %v219 = vmul.f32 %v213, %v216
      %v220 = vld [vmem:[%s4] sm:$0x1]
      %v222 = vperm.slane %v220, 0
      %v224 = vadd.f32 %v218, %v222
      %v225 = vadd.f32 %v219, %v222
      %226 = vst.msk [vmem:[#allocation2] sm:$0xff] %vm41, %v224
      %227 = vst.msk [vmem:[#allocation2 + $0x8] sm:$0xff] %vm41, %v225
    $region33: #{tpu_custom_call.1} parent=1 // pred_fallthru
      _
    %v228 = vld [vmem:[#allocation2] sm:$0xff]
    %v229 = vld [vmem:[#allocation2 + $0x8] sm:$0xff]
    %v230 = vld [vmem:[%s5] sm:$0xff]
    %v231 = vld [vmem:[%s5 + $0x8] sm:$0xff]
    %v232 = vld [vmem:[%s5 + $0x10] sm:$0xff]
    %v233 = vld [vmem:[%s5 + $0x18] sm:$0xff]
    %v234 = vld [vmem:[%s5 + $0x20] sm:$0xff]
    %v235 = vld [vmem:[%s5 + $0x28] sm:$0xff]
    %v236 = vld [vmem:[%s5 + $0x30] sm:$0xff]
    %v237 = vld [vmem:[%s5 + $0x38] sm:$0xff]
    %v238 = vld [vmem:[%s5 + $0x40] sm:$0xff]
    %v239 = vld [vmem:[%s5 + $0x48] sm:$0xff]
    %v240 = vld [vmem:[%s5 + $0x50] sm:$0xff]
    %v241 = vld [vmem:[%s5 + $0x58] sm:$0xff]
    %v242 = vld [vmem:[%s5 + $0x60] sm:$0xff]
    %v243 = vld [vmem:[%s5 + $0x68] sm:$0xff]
    %v244 = vld [vmem:[%s5 + $0x70] sm:$0xff]
    %v245 = vld [vmem:[%s5 + $0x78] sm:$0xff]
    %v246 = vld [vmem:[%s6] sm:$0x1]
    %v248 = vperm.slane %v246, 0
    %vm250 = vcmask 261120
    %v252 = vsel %vm250, %v228, 0
    %v255 = vsel %vm250, %v229, 0
    %v258 = vsel %vm250, %v230, 0
    %v261 = vsel %vm250, %v231, 0
    %v264 = vsel %vm250, %v232, 0
    %v267 = vsel %vm250, %v233, 0
    %v270 = vsel %vm250, %v234, 0
    %v273 = vsel %vm250, %v235, 0
    %v276 = vsel %vm250, %v236, 0
    %v279 = vsel %vm250, %v237, 0
    %v282 = vsel %vm250, %v238, 0
    %v285 = vsel %vm250, %v239, 0
    %v288 = vsel %vm250, %v240, 0
    %v291 = vsel %vm250, %v241, 0
    %v294 = vsel %vm250, %v242, 0
    %v297 = vsel %vm250, %v243, 0
    %v300 = vsel %vm250, %v244, 0
    %v303 = vsel %vm250, %v245, 0
    %305 = vmatpush.xpose.msra.mxu0 %v303
    %306 = vmatpush.xpose.msra.mxu0 %v300
    %307 = vmatpush.xpose.msra.mxu0 %v297
    %308 = vmatpush.xpose.msra.mxu0 %v294
    %309 = vmatpush.xpose.msra.mxu0 %v291
    %310 = vmatpush.xpose.msra.mxu0 %v288
    %311 = vmatpush.xpose.msra.mxu0 %v285
    %312 = vmatpush.xpose.msra.mxu0 %v282
    %313 = vmatpush.xpose.msra.mxu0 %v279
    %314 = vmatpush.xpose.msra.mxu0 %v276
    %315 = vmatpush.xpose.msra.mxu0 %v273
    %316 = vmatpush.xpose.msra.mxu0 %v270
    %317 = vmatpush.xpose.msra.mxu0 %v267
    %318 = vmatpush.xpose.msra.mxu0 %v264
    %319 = vmatpush.xpose.msra.mxu0 %v261
    %320 = vmatpush.xpose.msra.mxu0 %v258
    %321 = vmatmul.f32.gmra.mxu0 %v252
    %v322 = vpop.f32.mrf.mxu0
    %v323 = vadd.f32 %v248, %v322
    %324 = vmatmul.f32.gmra.mxu0 %v255
    %v325 = vpop.f32.mrf.mxu0
    %v326 = vadd.f32 %v248, %v325
    %327 = vdwg.mxu0
    %328 = vst [vmem:[#allocation3] sm:$0xff] %v323
    %329 = vst [vmem:[#allocation3 + $0x8] sm:$0xff] %v326
    // Predicated region
    $region34: #{tpu_custom_call.1} parent=1 // pred_check
      _
    $region35: #{tpu_custom_call.1} parent=1 // pred_check_branch
      %331 = sbr.rel (0) target = $region37
    $region36: #{tpu_custom_call.1} parent=1 // pred_region
      %333 = vsyncadd [#allocation4], 0
      %s334 = sshll.u32 [#allocation3], 4
      %s335 = int_to_ptr.vmem [resolvable:$true] %s334
      %s336 = sshll.u32 %s7, 4
      %s337 = int_to_ptr.hbm [resolvable:$true] %s336
      %342 = dma.vmem_to_hbm [thread:$0]  %s335, 256, %s337, [#allocation4], 128, 128, 8
    $region37: #{tpu_custom_call.1} parent=1 // pred_fallthru
      _
    // Predicated region
    $region38: #{tpu_custom_call.1} parent=1 // pred_check
      _
    $region39: #{tpu_custom_call.1} parent=1 // pred_check_branch
      %344 = sbr.rel (0) target = $region41
    $region40: #{tpu_custom_call.1} parent=1 // pred_region
      %346 = dma.done [#allocation4], 256
    $region41: #{tpu_custom_call.1} parent=1 // pred_fallthru
      _
    %347 = vsyncpa [#allocation4], 1

</llo_original>
